<compile_context>
chip_gen: v5e
topology: v5e:2x2
jax: 0.10.0
libtpu: 0.0.40
codegen_flags: <defaults>
</compile_context>

<pallas_src>
import functools

import jax
import jax.numpy as jnp
from jax import lax
from jax.experimental import pallas as pl
from jax.experimental.pallas import tpu as pltpu


def bow_kernel(idx_ref, emb_ref, out_ref, *, batch_tile, seq_len):
    # idx_ref: SMEM (B_pad, L) int32   scalar-prefetched word ids
    # emb_ref: VMEM (nwords, ntags)    embedding table, resident across grid
    # out_ref: VMEM (Bt, ntags)        output tile for this batch tile
    i = pl.program_id(0)
    ntags = out_ref.shape[-1]

    # Static loop over the (small) batch tile; static row offset for stores.
    for b in range(batch_tile):
        row = i * batch_tile + b

        def add_word(l, acc):
            w = idx_ref[row, l]                                   # SMEM scalar read
            return acc + emb_ref[pl.ds(w, 1), :].astype(jnp.float32)

        acc = lax.fori_loop(0, seq_len, add_word,
                            jnp.zeros((1, ntags), jnp.float32), unroll=True)
        out_ref[b:b + 1, :] = acc


def bow_classifier_batch(x_idx, emb_weight, bias, *, batch_tile=8):
    """Batched BoW forward.

    x_idx:      (B, L) int     word indices (one bag/sentence per row)
    emb_weight: (nwords, ntags) embedding table (any float dtype; kept as-is)
    bias:       (ntags,) float
    returns     (B, ntags) float32 — row b == BoWClassifier.forward(x_idx[b]) squeezed.
    """
    B, L = x_idx.shape
    nwords, ntags = emb_weight.shape

    # torch.nn.Embedding errors on OOB indices; clip so valid inputs are
    # unchanged and invalid ones cannot trigger an OOB VMEM read.
    idx = jnp.clip(x_idx.astype(jnp.int32), 0, nwords - 1)

    # Pad batch to a multiple of the tile (padded bags gather row 0 and are
    # discarded after the call).
    B_pad = ((B + batch_tile - 1) // batch_tile) * batch_tile
    if B_pad != B:
        idx = jnp.pad(idx, ((0, B_pad - B), (0, 0)))

    grid_spec = pltpu.PrefetchScalarGridSpec(
        num_scalar_prefetch=1,                      # idx -> SMEM
        grid=(B_pad // batch_tile,),
        in_specs=[
            # Whole table as one block with a constant index_map: fetched
            # once, resident in VMEM for every grid step.
            pl.BlockSpec((nwords, ntags), lambda i, idx_ref: (0, 0)),
        ],
        out_specs=pl.BlockSpec((batch_tile, ntags), lambda i, idx_ref: (i, 0)),
    )

    kernel = functools.partial(bow_kernel, batch_tile=batch_tile, seq_len=L)

    out = pl.pallas_call(
        kernel,
        out_shape=jax.ShapeDtypeStruct((B_pad, ntags), jnp.float32),
        grid_spec=grid_spec,
        compiler_params=pltpu.CompilerParams(
            dimension_semantics=("parallel",)),     # 2-TC sharding on v7x
    )(idx, emb_weight)

    # Bias added once in the wrapper (review: don't stream it as a grid input).
    return out[:B] + bias.astype(jnp.float32)[None, :]


def bow_classifier(x_idx, emb_weight, bias):
    """Module-equivalent forward: x_idx (L,) -> (1, ntags)."""
    return bow_classifier_batch(x_idx.reshape(1, -1), emb_weight, bias)


def xavier_uniform(key, shape):
    fan_in, fan_out = shape
    bound = (6.0 / (fan_in + fan_out)) ** 0.5
    return jax.random.uniform(key, shape, jnp.float32, -bound, bound)


if __name__ == "__main__":
    nwords, ntags = 128, 8
    B, L = 16, 8

    key = jax.random.PRNGKey(0)
    k_emb, k_idx = jax.random.split(key)

    # Deterministic parameter init (xavier_uniform like the PyTorch module).
    emb_weight = xavier_uniform(k_emb, (nwords, ntags))
    bias = jnp.zeros((ntags,), jnp.float32)

    # Batch of B word-index sequences.
    X = jax.random.randint(k_idx, (B, L), 0, nwords, dtype=jnp.int32)

    # Batched call: all sequences in one pallas_call.
    out_b = jax.block_until_ready(bow_classifier_batch(X, emb_weight, bias))
    ref_b = jnp.sum(emb_weight[X], axis=1) + bias[None, :]
    assert out_b.shape == (B, ntags), out_b.shape
    assert jnp.allclose(out_b, ref_b, atol=1e-5), (out_b, ref_b)

    # Module-equivalent single-sequence forward (same semantics as PyTorch).
    out_1 = jax.block_until_ready(bow_classifier(X[0], emb_weight, bias))
    ref_1 = (jnp.sum(emb_weight[X[0]], axis=0) + bias).reshape(1, -1)
    assert out_1.shape == (1, ntags), out_1.shape
    assert jnp.allclose(out_1, ref_1, atol=1e-5), (out_1, ref_1)

    print("KERNEL_OK")
</pallas_src>

<mosaic_0001>
module attributes {stable_mosaic.version = 11 : i64} {
  func.func @bow_kernel(%arg0: i32, %arg1: memref<16x8xi32, #tpu.memory_space<smem>>, %arg2: memref<128x8xf32, #tpu.memory_space<vmem>>, %arg3: memref<8x8xf32, #tpu.memory_space<vmem>>) attributes {dimension_semantics = [#tpu.dimension_semantics<parallel>], iteration_bounds = array<i64: 2>, scalar_prefetch = 1 : i64, scratch_operands = 0 : i64, tpu.core_type = #tpu.core_type<tc>, window_params = [{pipeline_mode = #tpu.pipeline_mode<synchronous>, transform_indices = @transform_0, window_bounds = array<i64: 128, 8>}, {transform_indices = @transform_1, window_bounds = array<i64: 8, 8>}]} {
    %c8_i32 = arith.constant 8 : i32
    %0 = arith.muli %arg0, %c8_i32 : i32
    %c0_i32 = arith.constant 0 : i32
    %1 = arith.addi %0, %c0_i32 : i32
    %cst = arith.constant 0.000000e+00 : f32
    %2 = vector.broadcast %cst : f32 to vector<1x8xf32>
    %c0_i32_0 = arith.constant 0 : i32
    %3 = arith.index_cast %1 : i32 to index
    %4 = arith.index_cast %c0_i32_0 : i32 to index
    %5 = memref.load %arg1[%3, %4] : memref<16x8xi32, #tpu.memory_space<smem>>
    %6 = arith.index_cast %5 : i32 to index
    %c0 = arith.constant 0 : index
    %7 = vector.load %arg2[%6, %c0] : memref<128x8xf32, #tpu.memory_space<vmem>>, vector<1x8xf32>
    %8 = arith.addf %2, %7 : vector<1x8xf32>
    %c1_i32 = arith.constant 1 : i32
    %9 = arith.index_cast %1 : i32 to index
    %10 = arith.index_cast %c1_i32 : i32 to index
    %11 = memref.load %arg1[%9, %10] : memref<16x8xi32, #tpu.memory_space<smem>>
    %12 = arith.index_cast %11 : i32 to index
    %c0_1 = arith.constant 0 : index
    %13 = vector.load %arg2[%12, %c0_1] : memref<128x8xf32, #tpu.memory_space<vmem>>, vector<1x8xf32>
    %14 = arith.addf %8, %13 : vector<1x8xf32>
    %c2_i32 = arith.constant 2 : i32
    %15 = arith.index_cast %1 : i32 to index
    %16 = arith.index_cast %c2_i32 : i32 to index
    %17 = memref.load %arg1[%15, %16] : memref<16x8xi32, #tpu.memory_space<smem>>
    %18 = arith.index_cast %17 : i32 to index
    %c0_2 = arith.constant 0 : index
    %19 = vector.load %arg2[%18, %c0_2] : memref<128x8xf32, #tpu.memory_space<vmem>>, vector<1x8xf32>
    %20 = arith.addf %14, %19 : vector<1x8xf32>
    %c3_i32 = arith.constant 3 : i32
    %21 = arith.index_cast %1 : i32 to index
    %22 = arith.index_cast %c3_i32 : i32 to index
    %23 = memref.load %arg1[%21, %22] : memref<16x8xi32, #tpu.memory_space<smem>>
    %24 = arith.index_cast %23 : i32 to index
    %c0_3 = arith.constant 0 : index
    %25 = vector.load %arg2[%24, %c0_3] : memref<128x8xf32, #tpu.memory_space<vmem>>, vector<1x8xf32>
    %26 = arith.addf %20, %25 : vector<1x8xf32>
    %c4_i32 = arith.constant 4 : i32
    %27 = arith.index_cast %1 : i32 to index
    %28 = arith.index_cast %c4_i32 : i32 to index
    %29 = memref.load %arg1[%27, %28] : memref<16x8xi32, #tpu.memory_space<smem>>
    %30 = arith.index_cast %29 : i32 to index
    %c0_4 = arith.constant 0 : index
    %31 = vector.load %arg2[%30, %c0_4] : memref<128x8xf32, #tpu.memory_space<vmem>>, vector<1x8xf32>
    %32 = arith.addf %26, %31 : vector<1x8xf32>
    %c5_i32 = arith.constant 5 : i32
    %33 = arith.index_cast %1 : i32 to index
    %34 = arith.index_cast %c5_i32 : i32 to index
    %35 = memref.load %arg1[%33, %34] : memref<16x8xi32, #tpu.memory_space<smem>>
    %36 = arith.index_cast %35 : i32 to index
    %c0_5 = arith.constant 0 : index
    %37 = vector.load %arg2[%36, %c0_5] : memref<128x8xf32, #tpu.memory_space<vmem>>, vector<1x8xf32>
    %38 = arith.addf %32, %37 : vector<1x8xf32>
    %c6_i32 = arith.constant 6 : i32
    %39 = arith.index_cast %1 : i32 to index
    %40 = arith.index_cast %c6_i32 : i32 to index
    %41 = memref.load %arg1[%39, %40] : memref<16x8xi32, #tpu.memory_space<smem>>
    %42 = arith.index_cast %41 : i32 to index
    %c0_6 = arith.constant 0 : index
    %43 = vector.load %arg2[%42, %c0_6] : memref<128x8xf32, #tpu.memory_space<vmem>>, vector<1x8xf32>
    %44 = arith.addf %38, %43 : vector<1x8xf32>
    %c7_i32 = arith.constant 7 : i32
    %45 = arith.index_cast %1 : i32 to index
    %46 = arith.index_cast %c7_i32 : i32 to index
    %47 = memref.load %arg1[%45, %46] : memref<16x8xi32, #tpu.memory_space<smem>>
    %48 = arith.index_cast %47 : i32 to index
    %c0_7 = arith.constant 0 : index
    %49 = vector.load %arg2[%48, %c0_7] : memref<128x8xf32, #tpu.memory_space<vmem>>, vector<1x8xf32>
    %50 = arith.addf %44, %49 : vector<1x8xf32>
    %c8_i32_8 = arith.constant 8 : i32
    %c0_9 = arith.constant 0 : index
    %c0_10 = arith.constant 0 : index
    %51 = vector.load %arg3[%c0_9, %c0_10] : memref<8x8xf32, #tpu.memory_space<vmem>>, vector<1x8xf32>
    tpu.vector_store %arg3[%c0_9, %c0_10], %50 {strides = array<i32>} : memref<8x8xf32, #tpu.memory_space<vmem>>, vector<1x8xf32>,
    %c8_i32_11 = arith.constant 8 : i32
    %52 = arith.muli %arg0, %c8_i32_11 : i32
    %c1_i32_12 = arith.constant 1 : i32
    %53 = arith.addi %52, %c1_i32_12 : i32
    %cst_13 = arith.constant 0.000000e+00 : f32
    %54 = vector.broadcast %cst_13 : f32 to vector<1x8xf32>
    %c0_i32_14 = arith.constant 0 : i32
    %55 = arith.index_cast %53 : i32 to index
    %56 = arith.index_cast %c0_i32_14 : i32 to index
    %57 = memref.load %arg1[%55, %56] : memref<16x8xi32, #tpu.memory_space<smem>>
    %58 = arith.index_cast %57 : i32 to index
    %c0_15 = arith.constant 0 : index
    %59 = vector.load %arg2[%58, %c0_15] : memref<128x8xf32, #tpu.memory_space<vmem>>, vector<1x8xf32>
    %60 = arith.addf %54, %59 : vector<1x8xf32>
    %c1_i32_16 = arith.constant 1 : i32
    %61 = arith.index_cast %53 : i32 to index
    %62 = arith.index_cast %c1_i32_16 : i32 to index
    %63 = memref.load %arg1[%61, %62] : memref<16x8xi32, #tpu.memory_space<smem>>
    %64 = arith.index_cast %63 : i32 to index
    %c0_17 = arith.constant 0 : index
    %65 = vector.load %arg2[%64, %c0_17] : memref<128x8xf32, #tpu.memory_space<vmem>>, vector<1x8xf32>
    %66 = arith.addf %60, %65 : vector<1x8xf32>
    %c2_i32_18 = arith.constant 2 : i32
    %67 = arith.index_cast %53 : i32 to index
    %68 = arith.index_cast %c2_i32_18 : i32 to index
    %69 = memref.load %arg1[%67, %68] : memref<16x8xi32, #tpu.memory_space<smem>>
    %70 = arith.index_cast %69 : i32 to index
    %c0_19 = arith.constant 0 : index
    %71 = vector.load %arg2[%70, %c0_19] : memref<128x8xf32, #tpu.memory_space<vmem>>, vector<1x8xf32>
    %72 = arith.addf %66, %71 : vector<1x8xf32>
    %c3_i32_20 = arith.constant 3 : i32
    %73 = arith.index_cast %53 : i32 to index
    %74 = arith.index_cast %c3_i32_20 : i32 to index
    %75 = memref.load %arg1[%73, %74] : memref<16x8xi32, #tpu.memory_space<smem>>
    %76 = arith.index_cast %75 : i32 to index
    %c0_21 = arith.constant 0 : index
    %77 = vector.load %arg2[%76, %c0_21] : memref<128x8xf32, #tpu.memory_space<vmem>>, vector<1x8xf32>
    %78 = arith.addf %72, %77 : vector<1x8xf32>
    %c4_i32_22 = arith.constant 4 : i32
    %79 = arith.index_cast %53 : i32 to index
    %80 = arith.index_cast %c4_i32_22 : i32 to index
    %81 = memref.load %arg1[%79, %80] : memref<16x8xi32, #tpu.memory_space<smem>>
    %82 = arith.index_cast %81 : i32 to index
    %c0_23 = arith.constant 0 : index
    %83 = vector.load %arg2[%82, %c0_23] : memref<128x8xf32, #tpu.memory_space<vmem>>, vector<1x8xf32>
    %84 = arith.addf %78, %83 : vector<1x8xf32>
    %c5_i32_24 = arith.constant 5 : i32
    %85 = arith.index_cast %53 : i32 to index
    %86 = arith.index_cast %c5_i32_24 : i32 to index
    %87 = memref.load %arg1[%85, %86] : memref<16x8xi32, #tpu.memory_space<smem>>
    %88 = arith.index_cast %87 : i32 to index
    %c0_25 = arith.constant 0 : index
    %89 = vector.load %arg2[%88, %c0_25] : memref<128x8xf32, #tpu.memory_space<vmem>>, vector<1x8xf32>
    %90 = arith.addf %84, %89 : vector<1x8xf32>
    %c6_i32_26 = arith.constant 6 : i32
    %91 = arith.index_cast %53 : i32 to index
    %92 = arith.index_cast %c6_i32_26 : i32 to index
    %93 = memref.load %arg1[%91, %92] : memref<16x8xi32, #tpu.memory_space<smem>>
    %94 = arith.index_cast %93 : i32 to index
    %c0_27 = arith.constant 0 : index
    %95 = vector.load %arg2[%94, %c0_27] : memref<128x8xf32, #tpu.memory_space<vmem>>, vector<1x8xf32>
    %96 = arith.addf %90, %95 : vector<1x8xf32>
    %c7_i32_28 = arith.constant 7 : i32
    %97 = arith.index_cast %53 : i32 to index
    %98 = arith.index_cast %c7_i32_28 : i32 to index
    %99 = memref.load %arg1[%97, %98] : memref<16x8xi32, #tpu.memory_space<smem>>
    %100 = arith.index_cast %99 : i32 to index
    %c0_29 = arith.constant 0 : index
    %101 = vector.load %arg2[%100, %c0_29] : memref<128x8xf32, #tpu.memory_space<vmem>>, vector<1x8xf32>
    %102 = arith.addf %96, %101 : vector<1x8xf32>
    %c8_i32_30 = arith.constant 8 : i32
    %c1 = arith.constant 1 : index
    %c0_31 = arith.constant 0 : index
    %103 = vector.load %arg3[%c1, %c0_31] : memref<8x8xf32, #tpu.memory_space<vmem>>, vector<1x8xf32>
    tpu.vector_store %arg3[%c1, %c0_31], %102 {strides = array<i32>} : memref<8x8xf32, #tpu.memory_space<vmem>>, vector<1x8xf32>,
    %c8_i32_32 = arith.constant 8 : i32
    %104 = arith.muli %arg0, %c8_i32_32 : i32
    %c2_i32_33 = arith.constant 2 : i32
    %105 = arith.addi %104, %c2_i32_33 : i32
    %cst_34 = arith.constant 0.000000e+00 : f32
    %106 = vector.broadcast %cst_34 : f32 to vector<1x8xf32>
    %c0_i32_35 = arith.constant 0 : i32
    %107 = arith.index_cast %105 : i32 to index
    %108 = arith.index_cast %c0_i32_35 : i32 to index
    %109 = memref.load %arg1[%107, %108] : memref<16x8xi32, #tpu.memory_space<smem>>
    %110 = arith.index_cast %109 : i32 to index
    %c0_36 = arith.constant 0 : index
    %111 = vector.load %arg2[%110, %c0_36] : memref<128x8xf32, #tpu.memory_space<vmem>>, vector<1x8xf32>
    %112 = arith.addf %106, %111 : vector<1x8xf32>
    %c1_i32_37 = arith.constant 1 : i32
    %113 = arith.index_cast %105 : i32 to index
    %114 = arith.index_cast %c1_i32_37 : i32 to index
    %115 = memref.load %arg1[%113, %114] : memref<16x8xi32, #tpu.memory_space<smem>>
    %116 = arith.index_cast %115 : i32 to index
    %c0_38 = arith.constant 0 : index
    %117 = vector.load %arg2[%116, %c0_38] : memref<128x8xf32, #tpu.memory_space<vmem>>, vector<1x8xf32>
    %118 = arith.addf %112, %117 : vector<1x8xf32>
    %c2_i32_39 = arith.constant 2 : i32
    %119 = arith.index_cast %105 : i32 to index
    %120 = arith.index_cast %c2_i32_39 : i32 to index
    %121 = memref.load %arg1[%119, %120] : memref<16x8xi32, #tpu.memory_space<smem>>
    %122 = arith.index_cast %121 : i32 to index
    %c0_40 = arith.constant 0 : index
    %123 = vector.load %arg2[%122, %c0_40] : memref<128x8xf32, #tpu.memory_space<vmem>>, vector<1x8xf32>
    %124 = arith.addf %118, %123 : vector<1x8xf32>
    %c3_i32_41 = arith.constant 3 : i32
    %125 = arith.index_cast %105 : i32 to index
    %126 = arith.index_cast %c3_i32_41 : i32 to index
    %127 = memref.load %arg1[%125, %126] : memref<16x8xi32, #tpu.memory_space<smem>>
    %128 = arith.index_cast %127 : i32 to index
    %c0_42 = arith.constant 0 : index
    %129 = vector.load %arg2[%128, %c0_42] : memref<128x8xf32, #tpu.memory_space<vmem>>, vector<1x8xf32>
    %130 = arith.addf %124, %129 : vector<1x8xf32>
    %c4_i32_43 = arith.constant 4 : i32
    %131 = arith.index_cast %105 : i32 to index
    %132 = arith.index_cast %c4_i32_43 : i32 to index
    %133 = memref.load %arg1[%131, %132] : memref<16x8xi32, #tpu.memory_space<smem>>
    %134 = arith.index_cast %133 : i32 to index
    %c0_44 = arith.constant 0 : index
    %135 = vector.load %arg2[%134, %c0_44] : memref<128x8xf32, #tpu.memory_space<vmem>>, vector<1x8xf32>
    %136 = arith.addf %130, %135 : vector<1x8xf32>
    %c5_i32_45 = arith.constant 5 : i32
    %137 = arith.index_cast %105 : i32 to index
    %138 = arith.index_cast %c5_i32_45 : i32 to index
    %139 = memref.load %arg1[%137, %138] : memref<16x8xi32, #tpu.memory_space<smem>>
    %140 = arith.index_cast %139 : i32 to index
    %c0_46 = arith.constant 0 : index
    %141 = vector.load %arg2[%140, %c0_46] : memref<128x8xf32, #tpu.memory_space<vmem>>, vector<1x8xf32>
    %142 = arith.addf %136, %141 : vector<1x8xf32>
    %c6_i32_47 = arith.constant 6 : i32
    %143 = arith.index_cast %105 : i32 to index
    %144 = arith.index_cast %c6_i32_47 : i32 to index
    %145 = memref.load %arg1[%143, %144] : memref<16x8xi32, #tpu.memory_space<smem>>
    %146 = arith.index_cast %145 : i32 to index
    %c0_48 = arith.constant 0 : index
    %147 = vector.load %arg2[%146, %c0_48] : memref<128x8xf32, #tpu.memory_space<vmem>>, vector<1x8xf32>
    %148 = arith.addf %142, %147 : vector<1x8xf32>
    %c7_i32_49 = arith.constant 7 : i32
    %149 = arith.index_cast %105 : i32 to index
    %150 = arith.index_cast %c7_i32_49 : i32 to index
    %151 = memref.load %arg1[%149, %150] : memref<16x8xi32, #tpu.memory_space<smem>>
    %152 = arith.index_cast %151 : i32 to index
    %c0_50 = arith.constant 0 : index
    %153 = vector.load %arg2[%152, %c0_50] : memref<128x8xf32, #tpu.memory_space<vmem>>, vector<1x8xf32>
    %154 = arith.addf %148, %153 : vector<1x8xf32>
    %c8_i32_51 = arith.constant 8 : i32
    %c2 = arith.constant 2 : index
    %c0_52 = arith.constant 0 : index
    %155 = vector.load %arg3[%c2, %c0_52] : memref<8x8xf32, #tpu.memory_space<vmem>>, vector<1x8xf32>
    tpu.vector_store %arg3[%c2, %c0_52], %154 {strides = array<i32>} : memref<8x8xf32, #tpu.memory_space<vmem>>, vector<1x8xf32>,
    %c8_i32_53 = arith.constant 8 : i32
    %156 = arith.muli %arg0, %c8_i32_53 : i32
    %c3_i32_54 = arith.constant 3 : i32
    %157 = arith.addi %156, %c3_i32_54 : i32
    %cst_55 = arith.constant 0.000000e+00 : f32
    %158 = vector.broadcast %cst_55 : f32 to vector<1x8xf32>
    %c0_i32_56 = arith.constant 0 : i32
    %159 = arith.index_cast %157 : i32 to index
    %160 = arith.index_cast %c0_i32_56 : i32 to index
    %161 = memref.load %arg1[%159, %160] : memref<16x8xi32, #tpu.memory_space<smem>>
    %162 = arith.index_cast %161 : i32 to index
    %c0_57 = arith.constant 0 : index
    %163 = vector.load %arg2[%162, %c0_57] : memref<128x8xf32, #tpu.memory_space<vmem>>, vector<1x8xf32>
    %164 = arith.addf %158, %163 : vector<1x8xf32>
    %c1_i32_58 = arith.constant 1 : i32
    %165 = arith.index_cast %157 : i32 to index
    %166 = arith.index_cast %c1_i32_58 : i32 to index
    %167 = memref.load %arg1[%165, %166] : memref<16x8xi32, #tpu.memory_space<smem>>
    %168 = arith.index_cast %167 : i32 to index
    %c0_59 = arith.constant 0 : index
    %169 = vector.load %arg2[%168, %c0_59] : memref<128x8xf32, #tpu.memory_space<vmem>>, vector<1x8xf32>
    %170 = arith.addf %164, %169 : vector<1x8xf32>
    %c2_i32_60 = arith.constant 2 : i32
    %171 = arith.index_cast %157 : i32 to index
    %172 = arith.index_cast %c2_i32_60 : i32 to index
    %173 = memref.load %arg1[%171, %172] : memref<16x8xi32, #tpu.memory_space<smem>>
    %174 = arith.index_cast %173 : i32 to index
    %c0_61 = arith.constant 0 : index
    %175 = vector.load %arg2[%174, %c0_61] : memref<128x8xf32, #tpu.memory_space<vmem>>, vector<1x8xf32>
    %176 = arith.addf %170, %175 : vector<1x8xf32>
    %c3_i32_62 = arith.constant 3 : i32
    %177 = arith.index_cast %157 : i32 to index
    %178 = arith.index_cast %c3_i32_62 : i32 to index
    %179 = memref.load %arg1[%177, %178] : memref<16x8xi32, #tpu.memory_space<smem>>
    %180 = arith.index_cast %179 : i32 to index
    %c0_63 = arith.constant 0 : index
    %181 = vector.load %arg2[%180, %c0_63] : memref<128x8xf32, #tpu.memory_space<vmem>>, vector<1x8xf32>
    %182 = arith.addf %176, %181 : vector<1x8xf32>
    %c4_i32_64 = arith.constant 4 : i32
    %183 = arith.index_cast %157 : i32 to index
    %184 = arith.index_cast %c4_i32_64 : i32 to index
    %185 = memref.load %arg1[%183, %184] : memref<16x8xi32, #tpu.memory_space<smem>>
    %186 = arith.index_cast %185 : i32 to index
    %c0_65 = arith.constant 0 : index
    %187 = vector.load %arg2[%186, %c0_65] : memref<128x8xf32, #tpu.memory_space<vmem>>, vector<1x8xf32>
    %188 = arith.addf %182, %187 : vector<1x8xf32>
    %c5_i32_66 = arith.constant 5 : i32
    %189 = arith.index_cast %157 : i32 to index
    %190 = arith.index_cast %c5_i32_66 : i32 to index
    %191 = memref.load %arg1[%189, %190] : memref<16x8xi32, #tpu.memory_space<smem>>
    %192 = arith.index_cast %191 : i32 to index
    %c0_67 = arith.constant 0 : index
    %193 = vector.load %arg2[%192, %c0_67] : memref<128x8xf32, #tpu.memory_space<vmem>>, vector<1x8xf32>
    %194 = arith.addf %188, %193 : vector<1x8xf32>
    %c6_i32_68 = arith.constant 6 : i32
    %195 = arith.index_cast %157 : i32 to index
    %196 = arith.index_cast %c6_i32_68 : i32 to index
    %197 = memref.load %arg1[%195, %196] : memref<16x8xi32, #tpu.memory_space<smem>>
    %198 = arith.index_cast %197 : i32 to index
    %c0_69 = arith.constant 0 : index
    %199 = vector.load %arg2[%198, %c0_69] : memref<128x8xf32, #tpu.memory_space<vmem>>, vector<1x8xf32>
    %200 = arith.addf %194, %199 : vector<1x8xf32>
    %c7_i32_70 = arith.constant 7 : i32
    %201 = arith.index_cast %157 : i32 to index
    %202 = arith.index_cast %c7_i32_70 : i32 to index
    %203 = memref.load %arg1[%201, %202] : memref<16x8xi32, #tpu.memory_space<smem>>
    %204 = arith.index_cast %203 : i32 to index
    %c0_71 = arith.constant 0 : index
    %205 = vector.load %arg2[%204, %c0_71] : memref<128x8xf32, #tpu.memory_space<vmem>>, vector<1x8xf32>
    %206 = arith.addf %200, %205 : vector<1x8xf32>
    %c8_i32_72 = arith.constant 8 : i32
    %c3 = arith.constant 3 : index
    %c0_73 = arith.constant 0 : index
    %207 = vector.load %arg3[%c3, %c0_73] : memref<8x8xf32, #tpu.memory_space<vmem>>, vector<1x8xf32>
    tpu.vector_store %arg3[%c3, %c0_73], %206 {strides = array<i32>} : memref<8x8xf32, #tpu.memory_space<vmem>>, vector<1x8xf32>,
    %c8_i32_74 = arith.constant 8 : i32
    %208 = arith.muli %arg0, %c8_i32_74 : i32
    %c4_i32_75 = arith.constant 4 : i32
    %209 = arith.addi %208, %c4_i32_75 : i32
    %cst_76 = arith.constant 0.000000e+00 : f32
    %210 = vector.broadcast %cst_76 : f32 to vector<1x8xf32>
    %c0_i32_77 = arith.constant 0 : i32
    %211 = arith.index_cast %209 : i32 to index
    %212 = arith.index_cast %c0_i32_77 : i32 to index
    %213 = memref.load %arg1[%211, %212] : memref<16x8xi32, #tpu.memory_space<smem>>
    %214 = arith.index_cast %213 : i32 to index
    %c0_78 = arith.constant 0 : index
    %215 = vector.load %arg2[%214, %c0_78] : memref<128x8xf32, #tpu.memory_space<vmem>>, vector<1x8xf32>
    %216 = arith.addf %210, %215 : vector<1x8xf32>
    %c1_i32_79 = arith.constant 1 : i32
    %217 = arith.index_cast %209 : i32 to index
    %218 = arith.index_cast %c1_i32_79 : i32 to index
    %219 = memref.load %arg1[%217, %218] : memref<16x8xi32, #tpu.memory_space<smem>>
    %220 = arith.index_cast %219 : i32 to index
    %c0_80 = arith.constant 0 : index
    %221 = vector.load %arg2[%220, %c0_80] : memref<128x8xf32, #tpu.memory_space<vmem>>, vector<1x8xf32>
    %222 = arith.addf %216, %221 : vector<1x8xf32>
    %c2_i32_81 = arith.constant 2 : i32
    %223 = arith.index_cast %209 : i32 to index
    %224 = arith.index_cast %c2_i32_81 : i32 to index
    %225 = memref.load %arg1[%223, %224] : memref<16x8xi32, #tpu.memory_space<smem>>
    %226 = arith.index_cast %225 : i32 to index
    %c0_82 = arith.constant 0 : index
    %227 = vector.load %arg2[%226, %c0_82] : memref<128x8xf32, #tpu.memory_space<vmem>>, vector<1x8xf32>
    %228 = arith.addf %222, %227 : vector<1x8xf32>
    %c3_i32_83 = arith.constant 3 : i32
    %229 = arith.index_cast %209 : i32 to index
    %230 = arith.index_cast %c3_i32_83 : i32 to index
    %231 = memref.load %arg1[%229, %230] : memref<16x8xi32, #tpu.memory_space<smem>>
    %232 = arith.index_cast %231 : i32 to index
    %c0_84 = arith.constant 0 : index
    %233 = vector.load %arg2[%232, %c0_84] : memref<128x8xf32, #tpu.memory_space<vmem>>, vector<1x8xf32>
    %234 = arith.addf %228, %233 : vector<1x8xf32>
    %c4_i32_85 = arith.constant 4 : i32
    %235 = arith.index_cast %209 : i32 to index
    %236 = arith.index_cast %c4_i32_85 : i32 to index
    %237 = memref.load %arg1[%235, %236] : memref<16x8xi32, #tpu.memory_space<smem>>
    %238 = arith.index_cast %237 : i32 to index
    %c0_86 = arith.constant 0 : index
    %239 = vector.load %arg2[%238, %c0_86] : memref<128x8xf32, #tpu.memory_space<vmem>>, vector<1x8xf32>
    %240 = arith.addf %234, %239 : vector<1x8xf32>
    %c5_i32_87 = arith.constant 5 : i32
    %241 = arith.index_cast %209 : i32 to index
    %242 = arith.index_cast %c5_i32_87 : i32 to index
    %243 = memref.load %arg1[%241, %242] : memref<16x8xi32, #tpu.memory_space<smem>>
    %244 = arith.index_cast %243 : i32 to index
    %c0_88 = arith.constant 0 : index
    %245 = vector.load %arg2[%244, %c0_88] : memref<128x8xf32, #tpu.memory_space<vmem>>, vector<1x8xf32>
    %246 = arith.addf %240, %245 : vector<1x8xf32>
    %c6_i32_89 = arith.constant 6 : i32
    %247 = arith.index_cast %209 : i32 to index
    %248 = arith.index_cast %c6_i32_89 : i32 to index
    %249 = memref.load %arg1[%247, %248] : memref<16x8xi32, #tpu.memory_space<smem>>
    %250 = arith.index_cast %249 : i32 to index
    %c0_90 = arith.constant 0 : index
    %251 = vector.load %arg2[%250, %c0_90] : memref<128x8xf32, #tpu.memory_space<vmem>>, vector<1x8xf32>
    %252 = arith.addf %246, %251 : vector<1x8xf32>
    %c7_i32_91 = arith.constant 7 : i32
    %253 = arith.index_cast %209 : i32 to index
    %254 = arith.index_cast %c7_i32_91 : i32 to index
    %255 = memref.load %arg1[%253, %254] : memref<16x8xi32, #tpu.memory_space<smem>>
    %256 = arith.index_cast %255 : i32 to index
    %c0_92 = arith.constant 0 : index
    %257 = vector.load %arg2[%256, %c0_92] : memref<128x8xf32, #tpu.memory_space<vmem>>, vector<1x8xf32>
    %258 = arith.addf %252, %257 : vector<1x8xf32>
    %c8_i32_93 = arith.constant 8 : i32
    %c4 = arith.constant 4 : index
    %c0_94 = arith.constant 0 : index
    %259 = vector.load %arg3[%c4, %c0_94] : memref<8x8xf32, #tpu.memory_space<vmem>>, vector<1x8xf32>
    tpu.vector_store %arg3[%c4, %c0_94], %258 {strides = array<i32>} : memref<8x8xf32, #tpu.memory_space<vmem>>, vector<1x8xf32>,
    %c8_i32_95 = arith.constant 8 : i32
    %260 = arith.muli %arg0, %c8_i32_95 : i32
    %c5_i32_96 = arith.constant 5 : i32
    %261 = arith.addi %260, %c5_i32_96 : i32
    %cst_97 = arith.constant 0.000000e+00 : f32
    %262 = vector.broadcast %cst_97 : f32 to vector<1x8xf32>
    %c0_i32_98 = arith.constant 0 : i32
    %263 = arith.index_cast %261 : i32 to index
    %264 = arith.index_cast %c0_i32_98 : i32 to index
    %265 = memref.load %arg1[%263, %264] : memref<16x8xi32, #tpu.memory_space<smem>>
    %266 = arith.index_cast %265 : i32 to index
    %c0_99 = arith.constant 0 : index
    %267 = vector.load %arg2[%266, %c0_99] : memref<128x8xf32, #tpu.memory_space<vmem>>, vector<1x8xf32>
    %268 = arith.addf %262, %267 : vector<1x8xf32>
    %c1_i32_100 = arith.constant 1 : i32
    %269 = arith.index_cast %261 : i32 to index
    %270 = arith.index_cast %c1_i32_100 : i32 to index
    %271 = memref.load %arg1[%269, %270] : memref<16x8xi32, #tpu.memory_space<smem>>
    %272 = arith.index_cast %271 : i32 to index
    %c0_101 = arith.constant 0 : index
    %273 = vector.load %arg2[%272, %c0_101] : memref<128x8xf32, #tpu.memory_space<vmem>>, vector<1x8xf32>
    %274 = arith.addf %268, %273 : vector<1x8xf32>
    %c2_i32_102 = arith.constant 2 : i32
    %275 = arith.index_cast %261 : i32 to index
    %276 = arith.index_cast %c2_i32_102 : i32 to index
    %277 = memref.load %arg1[%275, %276] : memref<16x8xi32, #tpu.memory_space<smem>>
    %278 = arith.index_cast %277 : i32 to index
    %c0_103 = arith.constant 0 : index
    %279 = vector.load %arg2[%278, %c0_103] : memref<128x8xf32, #tpu.memory_space<vmem>>, vector<1x8xf32>
    %280 = arith.addf %274, %279 : vector<1x8xf32>
    %c3_i32_104 = arith.constant 3 : i32
    %281 = arith.index_cast %261 : i32 to index
    %282 = arith.index_cast %c3_i32_104 : i32 to index
    %283 = memref.load %arg1[%281, %282] : memref<16x8xi32, #tpu.memory_space<smem>>
    %284 = arith.index_cast %283 : i32 to index
    %c0_105 = arith.constant 0 : index
    %285 = vector.load %arg2[%284, %c0_105] : memref<128x8xf32, #tpu.memory_space<vmem>>, vector<1x8xf32>
    %286 = arith.addf %280, %285 : vector<1x8xf32>
    %c4_i32_106 = arith.constant 4 : i32
    %287 = arith.index_cast %261 : i32 to index
    %288 = arith.index_cast %c4_i32_106 : i32 to index
    %289 = memref.load %arg1[%287, %288] : memref<16x8xi32, #tpu.memory_space<smem>>
    %290 = arith.index_cast %289 : i32 to index
    %c0_107 = arith.constant 0 : index
    %291 = vector.load %arg2[%290, %c0_107] : memref<128x8xf32, #tpu.memory_space<vmem>>, vector<1x8xf32>
    %292 = arith.addf %286, %291 : vector<1x8xf32>
    %c5_i32_108 = arith.constant 5 : i32
    %293 = arith.index_cast %261 : i32 to index
    %294 = arith.index_cast %c5_i32_108 : i32 to index
    %295 = memref.load %arg1[%293, %294] : memref<16x8xi32, #tpu.memory_space<smem>>
    %296 = arith.index_cast %295 : i32 to index
    %c0_109 = arith.constant 0 : index
    %297 = vector.load %arg2[%296, %c0_109] : memref<128x8xf32, #tpu.memory_space<vmem>>, vector<1x8xf32>
    %298 = arith.addf %292, %297 : vector<1x8xf32>
    %c6_i32_110 = arith.constant 6 : i32
    %299 = arith.index_cast %261 : i32 to index
    %300 = arith.index_cast %c6_i32_110 : i32 to index
    %301 = memref.load %arg1[%299, %300] : memref<16x8xi32, #tpu.memory_space<smem>>
    %302 = arith.index_cast %301 : i32 to index
    %c0_111 = arith.constant 0 : index
    %303 = vector.load %arg2[%302, %c0_111] : memref<128x8xf32, #tpu.memory_space<vmem>>, vector<1x8xf32>
    %304 = arith.addf %298, %303 : vector<1x8xf32>
    %c7_i32_112 = arith.constant 7 : i32
    %305 = arith.index_cast %261 : i32 to index
    %306 = arith.index_cast %c7_i32_112 : i32 to index
    %307 = memref.load %arg1[%305, %306] : memref<16x8xi32, #tpu.memory_space<smem>>
    %308 = arith.index_cast %307 : i32 to index
    %c0_113 = arith.constant 0 : index
    %309 = vector.load %arg2[%308, %c0_113] : memref<128x8xf32, #tpu.memory_space<vmem>>, vector<1x8xf32>
    %310 = arith.addf %304, %309 : vector<1x8xf32>
    %c8_i32_114 = arith.constant 8 : i32
    %c5 = arith.constant 5 : index
    %c0_115 = arith.constant 0 : index
    %311 = vector.load %arg3[%c5, %c0_115] : memref<8x8xf32, #tpu.memory_space<vmem>>, vector<1x8xf32>
    tpu.vector_store %arg3[%c5, %c0_115], %310 {strides = array<i32>} : memref<8x8xf32, #tpu.memory_space<vmem>>, vector<1x8xf32>,
    %c8_i32_116 = arith.constant 8 : i32
    %312 = arith.muli %arg0, %c8_i32_116 : i32
    %c6_i32_117 = arith.constant 6 : i32
    %313 = arith.addi %312, %c6_i32_117 : i32
    %cst_118 = arith.constant 0.000000e+00 : f32
    %314 = vector.broadcast %cst_118 : f32 to vector<1x8xf32>
    %c0_i32_119 = arith.constant 0 : i32
    %315 = arith.index_cast %313 : i32 to index
    %316 = arith.index_cast %c0_i32_119 : i32 to index
    %317 = memref.load %arg1[%315, %316] : memref<16x8xi32, #tpu.memory_space<smem>>
    %318 = arith.index_cast %317 : i32 to index
    %c0_120 = arith.constant 0 : index
    %319 = vector.load %arg2[%318, %c0_120] : memref<128x8xf32, #tpu.memory_space<vmem>>, vector<1x8xf32>
    %320 = arith.addf %314, %319 : vector<1x8xf32>
    %c1_i32_121 = arith.constant 1 : i32
    %321 = arith.index_cast %313 : i32 to index
    %322 = arith.index_cast %c1_i32_121 : i32 to index
    %323 = memref.load %arg1[%321, %322] : memref<16x8xi32, #tpu.memory_space<smem>>
    %324 = arith.index_cast %323 : i32 to index
    %c0_122 = arith.constant 0 : index
    %325 = vector.load %arg2[%324, %c0_122] : memref<128x8xf32, #tpu.memory_space<vmem>>, vector<1x8xf32>
    %326 = arith.addf %320, %325 : vector<1x8xf32>
    %c2_i32_123 = arith.constant 2 : i32
    %327 = arith.index_cast %313 : i32 to index
    %328 = arith.index_cast %c2_i32_123 : i32 to index
    %329 = memref.load %arg1[%327, %328] : memref<16x8xi32, #tpu.memory_space<smem>>
    %330 = arith.index_cast %329 : i32 to index
    %c0_124 = arith.constant 0 : index
    %331 = vector.load %arg2[%330, %c0_124] : memref<128x8xf32, #tpu.memory_space<vmem>>, vector<1x8xf32>
    %332 = arith.addf %326, %331 : vector<1x8xf32>
    %c3_i32_125 = arith.constant 3 : i32
    %333 = arith.index_cast %313 : i32 to index
    %334 = arith.index_cast %c3_i32_125 : i32 to index
    %335 = memref.load %arg1[%333, %334] : memref<16x8xi32, #tpu.memory_space<smem>>
    %336 = arith.index_cast %335 : i32 to index
    %c0_126 = arith.constant 0 : index
    %337 = vector.load %arg2[%336, %c0_126] : memref<128x8xf32, #tpu.memory_space<vmem>>, vector<1x8xf32>
    %338 = arith.addf %332, %337 : vector<1x8xf32>
    %c4_i32_127 = arith.constant 4 : i32
    %339 = arith.index_cast %313 : i32 to index
    %340 = arith.index_cast %c4_i32_127 : i32 to index
    %341 = memref.load %arg1[%339, %340] : memref<16x8xi32, #tpu.memory_space<smem>>
    %342 = arith.index_cast %341 : i32 to index
    %c0_128 = arith.constant 0 : index
    %343 = vector.load %arg2[%342, %c0_128] : memref<128x8xf32, #tpu.memory_space<vmem>>, vector<1x8xf32>
    %344 = arith.addf %338, %343 : vector<1x8xf32>
    %c5_i32_129 = arith.constant 5 : i32
    %345 = arith.index_cast %313 : i32 to index
    %346 = arith.index_cast %c5_i32_129 : i32 to index
    %347 = memref.load %arg1[%345, %346] : memref<16x8xi32, #tpu.memory_space<smem>>
    %348 = arith.index_cast %347 : i32 to index
    %c0_130 = arith.constant 0 : index
    %349 = vector.load %arg2[%348, %c0_130] : memref<128x8xf32, #tpu.memory_space<vmem>>, vector<1x8xf32>
    %350 = arith.addf %344, %349 : vector<1x8xf32>
    %c6_i32_131 = arith.constant 6 : i32
    %351 = arith.index_cast %313 : i32 to index
    %352 = arith.index_cast %c6_i32_131 : i32 to index
    %353 = memref.load %arg1[%351, %352] : memref<16x8xi32, #tpu.memory_space<smem>>
    %354 = arith.index_cast %353 : i32 to index
    %c0_132 = arith.constant 0 : index
    %355 = vector.load %arg2[%354, %c0_132] : memref<128x8xf32, #tpu.memory_space<vmem>>, vector<1x8xf32>
    %356 = arith.addf %350, %355 : vector<1x8xf32>
    %c7_i32_133 = arith.constant 7 : i32
    %357 = arith.index_cast %313 : i32 to index
    %358 = arith.index_cast %c7_i32_133 : i32 to index
    %359 = memref.load %arg1[%357, %358] : memref<16x8xi32, #tpu.memory_space<smem>>
    %360 = arith.index_cast %359 : i32 to index
    %c0_134 = arith.constant 0 : index
    %361 = vector.load %arg2[%360, %c0_134] : memref<128x8xf32, #tpu.memory_space<vmem>>, vector<1x8xf32>
    %362 = arith.addf %356, %361 : vector<1x8xf32>
    %c8_i32_135 = arith.constant 8 : i32
    %c6 = arith.constant 6 : index
    %c0_136 = arith.constant 0 : index
    %363 = vector.load %arg3[%c6, %c0_136] : memref<8x8xf32, #tpu.memory_space<vmem>>, vector<1x8xf32>
    tpu.vector_store %arg3[%c6, %c0_136], %362 {strides = array<i32>} : memref<8x8xf32, #tpu.memory_space<vmem>>, vector<1x8xf32>,
    %c8_i32_137 = arith.constant 8 : i32
    %364 = arith.muli %arg0, %c8_i32_137 : i32
    %c7_i32_138 = arith.constant 7 : i32
    %365 = arith.addi %364, %c7_i32_138 : i32
    %cst_139 = arith.constant 0.000000e+00 : f32
    %366 = vector.broadcast %cst_139 : f32 to vector<1x8xf32>
    %c0_i32_140 = arith.constant 0 : i32
    %367 = arith.index_cast %365 : i32 to index
    %368 = arith.index_cast %c0_i32_140 : i32 to index
    %369 = memref.load %arg1[%367, %368] : memref<16x8xi32, #tpu.memory_space<smem>>
    %370 = arith.index_cast %369 : i32 to index
    %c0_141 = arith.constant 0 : index
    %371 = vector.load %arg2[%370, %c0_141] : memref<128x8xf32, #tpu.memory_space<vmem>>, vector<1x8xf32>
    %372 = arith.addf %366, %371 : vector<1x8xf32>
    %c1_i32_142 = arith.constant 1 : i32
    %373 = arith.index_cast %365 : i32 to index
    %374 = arith.index_cast %c1_i32_142 : i32 to index
    %375 = memref.load %arg1[%373, %374] : memref<16x8xi32, #tpu.memory_space<smem>>
    %376 = arith.index_cast %375 : i32 to index
    %c0_143 = arith.constant 0 : index
    %377 = vector.load %arg2[%376, %c0_143] : memref<128x8xf32, #tpu.memory_space<vmem>>, vector<1x8xf32>
    %378 = arith.addf %372, %377 : vector<1x8xf32>
    %c2_i32_144 = arith.constant 2 : i32
    %379 = arith.index_cast %365 : i32 to index
    %380 = arith.index_cast %c2_i32_144 : i32 to index
    %381 = memref.load %arg1[%379, %380] : memref<16x8xi32, #tpu.memory_space<smem>>
    %382 = arith.index_cast %381 : i32 to index
    %c0_145 = arith.constant 0 : index
    %383 = vector.load %arg2[%382, %c0_145] : memref<128x8xf32, #tpu.memory_space<vmem>>, vector<1x8xf32>
    %384 = arith.addf %378, %383 : vector<1x8xf32>
    %c3_i32_146 = arith.constant 3 : i32
    %385 = arith.index_cast %365 : i32 to index
    %386 = arith.index_cast %c3_i32_146 : i32 to index
    %387 = memref.load %arg1[%385, %386] : memref<16x8xi32, #tpu.memory_space<smem>>
    %388 = arith.index_cast %387 : i32 to index
    %c0_147 = arith.constant 0 : index
    %389 = vector.load %arg2[%388, %c0_147] : memref<128x8xf32, #tpu.memory_space<vmem>>, vector<1x8xf32>
    %390 = arith.addf %384, %389 : vector<1x8xf32>
    %c4_i32_148 = arith.constant 4 : i32
    %391 = arith.index_cast %365 : i32 to index
    %392 = arith.index_cast %c4_i32_148 : i32 to index
    %393 = memref.load %arg1[%391, %392] : memref<16x8xi32, #tpu.memory_space<smem>>
    %394 = arith.index_cast %393 : i32 to index
    %c0_149 = arith.constant 0 : index
    %395 = vector.load %arg2[%394, %c0_149] : memref<128x8xf32, #tpu.memory_space<vmem>>, vector<1x8xf32>
    %396 = arith.addf %390, %395 : vector<1x8xf32>
    %c5_i32_150 = arith.constant 5 : i32
    %397 = arith.index_cast %365 : i32 to index
    %398 = arith.index_cast %c5_i32_150 : i32 to index
    %399 = memref.load %arg1[%397, %398] : memref<16x8xi32, #tpu.memory_space<smem>>
    %400 = arith.index_cast %399 : i32 to index
    %c0_151 = arith.constant 0 : index
    %401 = vector.load %arg2[%400, %c0_151] : memref<128x8xf32, #tpu.memory_space<vmem>>, vector<1x8xf32>
    %402 = arith.addf %396, %401 : vector<1x8xf32>
    %c6_i32_152 = arith.constant 6 : i32
    %403 = arith.index_cast %365 : i32 to index
    %404 = arith.index_cast %c6_i32_152 : i32 to index
    %405 = memref.load %arg1[%403, %404] : memref<16x8xi32, #tpu.memory_space<smem>>
    %406 = arith.index_cast %405 : i32 to index
    %c0_153 = arith.constant 0 : index
    %407 = vector.load %arg2[%406, %c0_153] : memref<128x8xf32, #tpu.memory_space<vmem>>, vector<1x8xf32>
    %408 = arith.addf %402, %407 : vector<1x8xf32>
    %c7_i32_154 = arith.constant 7 : i32
    %409 = arith.index_cast %365 : i32 to index
    %410 = arith.index_cast %c7_i32_154 : i32 to index
    %411 = memref.load %arg1[%409, %410] : memref<16x8xi32, #tpu.memory_space<smem>>
    %412 = arith.index_cast %411 : i32 to index
    %c0_155 = arith.constant 0 : index
    %413 = vector.load %arg2[%412, %c0_155] : memref<128x8xf32, #tpu.memory_space<vmem>>, vector<1x8xf32>
    %414 = arith.addf %408, %413 : vector<1x8xf32>
    %c8_i32_156 = arith.constant 8 : i32
    %c7 = arith.constant 7 : index
    %c0_157 = arith.constant 0 : index
    %415 = vector.load %arg3[%c7, %c0_157] : memref<8x8xf32, #tpu.memory_space<vmem>>, vector<1x8xf32>
    tpu.vector_store %arg3[%c7, %c0_157], %414 {strides = array<i32>} : memref<8x8xf32, #tpu.memory_space<vmem>>, vector<1x8xf32>,
    return
  }
  func.func @transform_0(%arg0: i32, %arg1: memref<16x8xi32, #tpu.memory_space<smem>>) -> (i32, i32) {
    %c0_i32 = arith.constant 0 : i32
    %c0_i32_0 = arith.constant 0 : i32
    %c0_i32_1 = arith.constant 0 : i32
    return %c0_i32, %c0_i32_0 : i32, i32
  }
  func.func @transform_1(%arg0: i32, %arg1: memref<16x8xi32, #tpu.memory_space<smem>>) -> (i32, i32) {
    %c0_i32 = arith.constant 0 : i32
    %c0_i32_0 = arith.constant 0 : i32
    return %arg0, %c0_i32 : i32, i32
  }
}

</mosaic_0001>

<llo_original>
// kernel: tpu_custom_call.1
$region0: #{tpu_custom_call.1}
  #allocation0 [shape = 'u32[]', space=smem, size = 0x4, offset = 0x4, fixed_abs, tag = 'smem constant byte address 0x4 - core index']
  #allocation1 [shape = 'u32[72,128]{1,0:T(1,128)}', space=vmem, size = 0x9000, scoped, tag = 'internal scratch']
  #allocation2 [shape = 's32[1]{0}', space=sflag, size = 0x4, scoped, tag = 'scoped memory for tpu_custom_call.1']
  #allocation3 [shape = 'u8[8192]{0}', space=smem, size = 0x2000, scoped, tag = 'prefetched SMEM operand 0']
  %s0 = inlined_call_operand.vmem [shape: s32[16,8], index: 0, kind: input, shape index: {}]
  %s1 = inlined_call_operand.vmem [shape: f32[128,8], index: 1, kind: input, shape index: {}]
  %s2 = inlined_call_operand.vmem [shape: f32[16,8], index: 2, kind: output, shape index: {}]
  %s3 = sld [smem:[#allocation0]]
  $region37: #{tpu_custom_call.1} parent=0
    _
  %s5 = ssub.s32 1, %s3
  %s6 = scalar_select 0, %s5, %s3
  %s8 = sshll.u32 %s0, 4
  %s9 = int_to_ptr.vmem [resolvable:$true] %s8
  %11 = dma.vmem_to_smem %s9, 256, [#allocation3], [#allocation2]
  %13 = dma.done [#allocation2], 256
  %14 = sfence
  loop: start=0, step=1, limit=4
  $region2: #{tpu_custom_call.1} parent=0 // loop_pre_header
    _
  $region3: #{tpu_custom_call.1} parent=0 // loop_header
    %s16 = sphi 0, %s20
    %p17 = scmp.ge.s32.totalorder %s16, 4
    %s24 = sphi 0, %s24
    %s26 = sphi 0, %s24
    %s27 = sphi 0, %s26
    %s41 = sphi 0, %s27
    %s47 = sphi 0, %s49
    %s50 = sphi 0, %s47
    %s51 = sphi 0, %s50
    %s67 = sphi 0, %s51
  $region4: #{tpu_custom_call.1} parent=0 // loop_header_branch
    %19 = sbr.rel (%p17) target = $region8
  $region5: #{tpu_custom_call.1} parent=0 // loop_body
    %s21 = ssub.s32 %s16, 1
    %s22 = ssub.s32 %s16, 2
    %s23 = sadd.s32 %s16, 1
    %s25 = sadd.s32 %s24, 1
    %p28 = scmp.eq.s32.totalorder %s16, 1
    %p29 = scmp.ne.s32.totalorder %s24, %s26
    %p30 = scmp.eq.s32.totalorder %s16, 0
    %p31 = por %p29, %p30
    %p32 = scmp.ne.s32.totalorder %s24, %s26
    %p33 = scmp.eq.s32.totalorder %s21, 1
    %p34 = por %p32, %p33
    %p35 = scmp.ne.s32.totalorder %s26, %s27
    %p36 = scmp.eq.s32.totalorder %s21, 0
    %p37 = por %p35, %p36
    %p38 = scmp.ne.s32.totalorder %s26, %s27
    %p39 = scmp.eq.s32.totalorder %s22, 1
    %p40 = por %p38, %p39
    %p42 = scmp.ne.s32.totalorder %s27, %s41
    %p43 = scmp.eq.s32.totalorder %s22, 0
    %p44 = por %p42, %p43
    %s45 = ssub.s32 %s16, %s23
    %p46 = scmp.eq.s32.totalorder %s45, 0
    %s48 = sadd.s32 %s47, 1
    %s49 = scalar_select %p46, %s47, %s48
    %p52 = pneg %p46
    %p53 = scmp.eq.s32.totalorder %s16, 1
    %p54 = por %p52, %p53
    %p55 = scmp.ne.s32.totalorder %s47, %s50
    %p56 = scmp.eq.s32.totalorder %s16, 0
    %p57 = por %p55, %p56
    %p58 = scmp.ne.s32.totalorder %s47, %s50
    %p59 = scmp.eq.s32.totalorder %s21, 1
    %p60 = por %p58, %p59
    %p61 = scmp.ne.s32.totalorder %s50, %s51
    %p62 = scmp.eq.s32.totalorder %s21, 0
    %p63 = por %p61, %p62
    %p64 = scmp.ne.s32.totalorder %s50, %s51
    %p65 = scmp.eq.s32.totalorder %s22, 1
    %p66 = por %p64, %p65
    %p68 = scmp.ne.s32.totalorder %s51, %s67
    %p69 = scmp.eq.s32.totalorder %s22, 0
    %p70 = por %p68, %p69
    %p71 = scmp.le.s32.totalorder 1, %s16
    %p72 = scmp.lt.s32.totalorder %s16, 3
    %p73 = pnand %p71, %p72
    %p74 = pneg %p73
    // Predicated region
    $region9: #{tpu_custom_call.1} parent=5 // pred_check
      _
    $region10: #{tpu_custom_call.1} parent=5 // pred_check_branch
      %76 = sbr.rel (%p73) target = $region12
    $region11: #{tpu_custom_call.1} parent=5 // pred_region
      %s77 = ssub.s32 %s16, 1
      // Predicated region
      $region13: #{tpu_custom_call.1} parent=11 // pred_check
        %p78 = pneg %p37
      $region14: #{tpu_custom_call.1} parent=11 // pred_check_branch
        %80 = sbr.rel (%p78) target = $region16
      $region15: #{tpu_custom_call.1} parent=11 // pred_region
        _
      $region16: #{tpu_custom_call.1} parent=11 // pred_fallthru
        _
    $region12: #{tpu_custom_call.1} parent=5 // pred_fallthru
      _
    %p81 = scmp.lt.s32.totalorder %s16, 2
    // Predicated region
    $region17: #{tpu_custom_call.1} parent=5 // pred_check
      %p82 = pneg %p81
    $region18: #{tpu_custom_call.1} parent=5 // pred_check_branch
      %84 = sbr.rel (%p82) target = $region20
    $region19: #{tpu_custom_call.1} parent=5 // pred_region
      _
    $region20: #{tpu_custom_call.1} parent=5 // pred_fallthru
      _
    %p85 = scmp.le.s32.totalorder 1, %s16
    %p86 = scmp.lt.s32.totalorder %s16, 3
    %p87 = pnand %p85, %p86
    %p88 = pneg %p87
    // Predicated region
    $region21: #{tpu_custom_call.1} parent=5 // pred_check
      _
    $region22: #{tpu_custom_call.1} parent=5 // pred_check_branch
      %90 = sbr.rel (%p87) target = $region24
    $region23: #{tpu_custom_call.1} parent=5 // pred_region
      %s91 = ssub.s32 %s16, 1
      %p92 = pneg %p37
      %p93 = pneg %p34
      %p94 = pneg %p63
      %p95 = pneg %p60
      %p96 = scmp.lt.s32.totalorder %s21, 1
      %s97 = scalar_select %p96, %s21, 1
      %s98 = smul.addr %s97, 8
      %s99 = scalar_lea.vmem %s2, %s98
      %p100 = scmp.lt.s32.totalorder %s21, 1
      %s101 = scalar_select %p100, %s21, 1
      %s102 = smul.addr %s101, 8
      %s103 = scalar_lea.vmem %s2, %s102
      %s104 = smul.u32 %s21, 8
      %s105 = smul.u32 %s104, 128
      %s106 = sld [smem:[#allocation3 + %s105]]
      %s107 = scalar_lea.vmem %s1, %s106
      %v108 = vld [vmem:[%s107] sm:$0x1]
      %v109 = vadd.f32 %v108, 0.0
      %s110 = sadd.s32 %s105, 1
      %s111 = sld [smem:[#allocation3 + %s110]]
      %s112 = scalar_lea.vmem %s1, %s111
      %v113 = vld [vmem:[%s112] sm:$0x1]
      %v114 = vadd.f32 %v109, %v113
      %s115 = sadd.s32 %s105, 2
      %s116 = sld [smem:[#allocation3 + %s115]]
      %s117 = scalar_lea.vmem %s1, %s116
      %v118 = vld [vmem:[%s117] sm:$0x1]
      %v119 = vadd.f32 %v114, %v118
      %s120 = sadd.s32 %s105, 3
      %s121 = sld [smem:[#allocation3 + %s120]]
      %s122 = scalar_lea.vmem %s1, %s121
      %v123 = vld [vmem:[%s122] sm:$0x1]
      %v124 = vadd.f32 %v119, %v123
      %s125 = sadd.s32 %s105, 4
      %s126 = sld [smem:[#allocation3 + %s125]]
      %s127 = scalar_lea.vmem %s1, %s126
      %v128 = vld [vmem:[%s127] sm:$0x1]
      %v129 = vadd.f32 %v124, %v128
      %s130 = sadd.s32 %s105, 5
      %s131 = sld [smem:[#allocation3 + %s130]]
      %s132 = scalar_lea.vmem %s1, %s131
      %v133 = vld [vmem:[%s132] sm:$0x1]
      %v134 = vadd.f32 %v129, %v133
      %s135 = sadd.s32 %s105, 6
      %s136 = sld [smem:[#allocation3 + %s135]]
      %s137 = scalar_lea.vmem %s1, %s136
      %v138 = vld [vmem:[%s137] sm:$0x1]
      %v139 = vadd.f32 %v134, %v138
      %s140 = sadd.s32 %s105, 7
      %s141 = sld [smem:[#allocation3 + %s140]]
      %s142 = scalar_lea.vmem %s1, %s141
      %v143 = vld [vmem:[%s142] sm:$0x1]
      %v144 = vadd.f32 %v139, %v143
      %vm145 = vcmask 57344
      %146 = vst.msk [vmem:[%s103] sm:$0x1] %vm145, %v144
      %s147 = sadd.s32 %s104, 1
      %s148 = smul.u32 %s147, 128
      %s149 = sld [smem:[#allocation3 + %s148]]
      %s150 = scalar_lea.vmem %s1, %s149
      %v151 = vld [vmem:[%s150] sm:$0x1]
      %v152 = vadd.f32 %v151, 0.0
      %s153 = sadd.s32 %s148, 1
      %s154 = sld [smem:[#allocation3 + %s153]]
      %s155 = scalar_lea.vmem %s1, %s154
      %v156 = vld [vmem:[%s155] sm:$0x1]
      %v157 = vadd.f32 %v152, %v156
      %s158 = sadd.s32 %s148, 2
      %s159 = sld [smem:[#allocation3 + %s158]]
      %s160 = scalar_lea.vmem %s1, %s159
      %v161 = vld [vmem:[%s160] sm:$0x1]
      %v162 = vadd.f32 %v157, %v161
      %s163 = sadd.s32 %s148, 3
      %s164 = sld [smem:[#allocation3 + %s163]]
      %s165 = scalar_lea.vmem %s1, %s164
      %v166 = vld [vmem:[%s165] sm:$0x1]
      %v167 = vadd.f32 %v162, %v166
      %s168 = sadd.s32 %s148, 4
      %s169 = sld [smem:[#allocation3 + %s168]]
      %s170 = scalar_lea.vmem %s1, %s169
      %v171 = vld [vmem:[%s170] sm:$0x1]
      %v172 = vadd.f32 %v167, %v171
      %s173 = sadd.s32 %s148, 5
      %s174 = sld [smem:[#allocation3 + %s173]]
      %s175 = scalar_lea.vmem %s1, %s174
      %v176 = vld [vmem:[%s175] sm:$0x1]
      %v177 = vadd.f32 %v172, %v176
      %s178 = sadd.s32 %s148, 6
      %s179 = sld [smem:[#allocation3 + %s178]]
      %s180 = scalar_lea.vmem %s1, %s179
      %v181 = vld [vmem:[%s180] sm:$0x1]
      %v182 = vadd.f32 %v177, %v181
      %s183 = sadd.s32 %s148, 7
      %s184 = sld [smem:[#allocation3 + %s183]]
      %s185 = scalar_lea.vmem %s1, %s184
      %v186 = vld [vmem:[%s185] sm:$0x1]
      %v187 = vadd.f32 %v182, %v186
      %188 = vst.msk [vmem:[%s103 + $0x1] sm:$0x1] %vm145, %v187
      %s189 = sadd.s32 %s104, 2
      %s190 = smul.u32 %s189, 128
      %s191 = sld [smem:[#allocation3 + %s190]]
      %s192 = scalar_lea.vmem %s1, %s191
      %v193 = vld [vmem:[%s192] sm:$0x1]
      %v194 = vadd.f32 %v193, 0.0
      %s195 = sadd.s32 %s190, 1
      %s196 = sld [smem:[#allocation3 + %s195]]
      %s197 = scalar_lea.vmem %s1, %s196
      %v198 = vld [vmem:[%s197] sm:$0x1]
      %v199 = vadd.f32 %v194, %v198
      %s200 = sadd.s32 %s190, 2
      %s201 = sld [smem:[#allocation3 + %s200]]
      %s202 = scalar_lea.vmem %s1, %s201
      %v203 = vld [vmem:[%s202] sm:$0x1]
      %v204 = vadd.f32 %v199, %v203
      %s205 = sadd.s32 %s190, 3
      %s206 = sld [smem:[#allocation3 + %s205]]
      %s207 = scalar_lea.vmem %s1, %s206
      %v208 = vld [vmem:[%s207] sm:$0x1]
      %v209 = vadd.f32 %v204, %v208
      %s210 = sadd.s32 %s190, 4
      %s211 = sld [smem:[#allocation3 + %s210]]
      %s212 = scalar_lea.vmem %s1, %s211
      %v213 = vld [vmem:[%s212] sm:$0x1]
      %v214 = vadd.f32 %v209, %v213
      %s215 = sadd.s32 %s190, 5
      %s216 = sld [smem:[#allocation3 + %s215]]
      %s217 = scalar_lea.vmem %s1, %s216
      %v218 = vld [vmem:[%s217] sm:$0x1]
      %v219 = vadd.f32 %v214, %v218
      %s220 = sadd.s32 %s190, 6
      %s221 = sld [smem:[#allocation3 + %s220]]
      %s222 = scalar_lea.vmem %s1, %s221
      %v223 = vld [vmem:[%s222] sm:$0x1]
      %v224 = vadd.f32 %v219, %v223
      %s225 = sadd.s32 %s190, 7
      %s226 = sld [smem:[#allocation3 + %s225]]
      %s227 = scalar_lea.vmem %s1, %s226
      %v228 = vld [vmem:[%s227] sm:$0x1]
      %v229 = vadd.f32 %v224, %v228
      %230 = vst.msk [vmem:[%s103 + $0x2] sm:$0x1] %vm145, %v229
      %s231 = sadd.s32 %s104, 3
      %s232 = smul.u32 %s231, 128
      %s233 = sld [smem:[#allocation3 + %s232]]
      %s234 = scalar_lea.vmem %s1, %s233
      %v235 = vld [vmem:[%s234] sm:$0x1]
      %v236 = vadd.f32 %v235, 0.0
      %s237 = sadd.s32 %s232, 1
      %s238 = sld [smem:[#allocation3 + %s237]]
      %s239 = scalar_lea.vmem %s1, %s238
      %v240 = vld [vmem:[%s239] sm:$0x1]
      %v241 = vadd.f32 %v236, %v240
      %s242 = sadd.s32 %s232, 2
      %s243 = sld [smem:[#allocation3 + %s242]]
      %s244 = scalar_lea.vmem %s1, %s243
      %v245 = vld [vmem:[%s244] sm:$0x1]
      %v246 = vadd.f32 %v241, %v245
      %s247 = sadd.s32 %s232, 3
      %s248 = sld [smem:[#allocation3 + %s247]]
      %s249 = scalar_lea.vmem %s1, %s248
      %v250 = vld [vmem:[%s249] sm:$0x1]
      %v251 = vadd.f32 %v246, %v250
      %s252 = sadd.s32 %s232, 4
      %s253 = sld [smem:[#allocation3 + %s252]]
      %s254 = scalar_lea.vmem %s1, %s253
      %v255 = vld [vmem:[%s254] sm:$0x1]
      %v256 = vadd.f32 %v251, %v255
      %s257 = sadd.s32 %s232, 5
      %s258 = sld [smem:[#allocation3 + %s257]]
      %s259 = scalar_lea.vmem %s1, %s258
      %v260 = vld [vmem:[%s259] sm:$0x1]
      %v261 = vadd.f32 %v256, %v260
      %s262 = sadd.s32 %s232, 6
      %s263 = sld [smem:[#allocation3 + %s262]]
      %s264 = scalar_lea.vmem %s1, %s263
      %v265 = vld [vmem:[%s264] sm:$0x1]
      %v266 = vadd.f32 %v261, %v265
      %s267 = sadd.s32 %s232, 7
      %s268 = sld [smem:[#allocation3 + %s267]]
      %s269 = scalar_lea.vmem %s1, %s268
      %v270 = vld [vmem:[%s269] sm:$0x1]
      %v271 = vadd.f32 %v266, %v270
      %272 = vst.msk [vmem:[%s103 + $0x3] sm:$0x1] %vm145, %v271
      %s273 = sadd.s32 %s104, 4
      %s274 = smul.u32 %s273, 128
      %s275 = sld [smem:[#allocation3 + %s274]]
      %s276 = scalar_lea.vmem %s1, %s275
      %v277 = vld [vmem:[%s276] sm:$0x1]
      %v278 = vadd.f32 %v277, 0.0
      %s279 = sadd.s32 %s274, 1
      %s280 = sld [smem:[#allocation3 + %s279]]
      %s281 = scalar_lea.vmem %s1, %s280
      %v282 = vld [vmem:[%s281] sm:$0x1]
      %v283 = vadd.f32 %v278, %v282
      %s284 = sadd.s32 %s274, 2
      %s285 = sld [smem:[#allocation3 + %s284]]
      %s286 = scalar_lea.vmem %s1, %s285
      %v287 = vld [vmem:[%s286] sm:$0x1]
      %v288 = vadd.f32 %v283, %v287
      %s289 = sadd.s32 %s274, 3
      %s290 = sld [smem:[#allocation3 + %s289]]
      %s291 = scalar_lea.vmem %s1, %s290
      %v292 = vld [vmem:[%s291] sm:$0x1]
      %v293 = vadd.f32 %v288, %v292
      %s294 = sadd.s32 %s274, 4
      %s295 = sld [smem:[#allocation3 + %s294]]
      %s296 = scalar_lea.vmem %s1, %s295
      %v297 = vld [vmem:[%s296] sm:$0x1]
      %v298 = vadd.f32 %v293, %v297
      %s299 = sadd.s32 %s274, 5
      %s300 = sld [smem:[#allocation3 + %s299]]
      %s301 = scalar_lea.vmem %s1, %s300
      %v302 = vld [vmem:[%s301] sm:$0x1]
      %v303 = vadd.f32 %v298, %v302
      %s304 = sadd.s32 %s274, 6
      %s305 = sld [smem:[#allocation3 + %s304]]
      %s306 = scalar_lea.vmem %s1, %s305
      %v307 = vld [vmem:[%s306] sm:$0x1]
      %v308 = vadd.f32 %v303, %v307
      %s309 = sadd.s32 %s274, 7
      %s310 = sld [smem:[#allocation3 + %s309]]
      %s311 = scalar_lea.vmem %s1, %s310
      %v312 = vld [vmem:[%s311] sm:$0x1]
      %v313 = vadd.f32 %v308, %v312
      %314 = vst.msk [vmem:[%s103 + $0x4] sm:$0x1] %vm145, %v313
      %s315 = sadd.s32 %s104, 5
      %s316 = smul.u32 %s315, 128
      %s317 = sld [smem:[#allocation3 + %s316]]
      %s318 = scalar_lea.vmem %s1, %s317
      %v319 = vld [vmem:[%s318] sm:$0x1]
      %v320 = vadd.f32 %v319, 0.0
      %s321 = sadd.s32 %s316, 1
      %s322 = sld [smem:[#allocation3 + %s321]]
      %s323 = scalar_lea.vmem %s1, %s322
      %v324 = vld [vmem:[%s323] sm:$0x1]
      %v325 = vadd.f32 %v320, %v324
      %s326 = sadd.s32 %s316, 2
      %s327 = sld [smem:[#allocation3 + %s326]]
      %s328 = scalar_lea.vmem %s1, %s327
      %v329 = vld [vmem:[%s328] sm:$0x1]
      %v330 = vadd.f32 %v325, %v329
      %s331 = sadd.s32 %s316, 3
      %s332 = sld [smem:[#allocation3 + %s331]]
      %s333 = scalar_lea.vmem %s1, %s332
      %v334 = vld [vmem:[%s333] sm:$0x1]
      %v335 = vadd.f32 %v330, %v334
      %s336 = sadd.s32 %s316, 4
      %s337 = sld [smem:[#allocation3 + %s336]]
      %s338 = scalar_lea.vmem %s1, %s337
      %v339 = vld [vmem:[%s338] sm:$0x1]
      %v340 = vadd.f32 %v335, %v339
      %s341 = sadd.s32 %s316, 5
      %s342 = sld [smem:[#allocation3 + %s341]]
      %s343 = scalar_lea.vmem %s1, %s342
      %v344 = vld [vmem:[%s343] sm:$0x1]
      %v345 = vadd.f32 %v340, %v344
      %s346 = sadd.s32 %s316, 6
      %s347 = sld [smem:[#allocation3 + %s346]]
      %s348 = scalar_lea.vmem %s1, %s347
      %v349 = vld [vmem:[%s348] sm:$0x1]
      %v350 = vadd.f32 %v345, %v349
      %s351 = sadd.s32 %s316, 7
      %s352 = sld [smem:[#allocation3 + %s351]]
      %s353 = scalar_lea.vmem %s1, %s352
      %v354 = vld [vmem:[%s353] sm:$0x1]
      %v355 = vadd.f32 %v350, %v354
      %356 = vst.msk [vmem:[%s103 + $0x5] sm:$0x1] %vm145, %v355
      %s357 = sadd.s32 %s104, 6
      %s358 = smul.u32 %s357, 128
      %s359 = sld [smem:[#allocation3 + %s358]]
      %s360 = scalar_lea.vmem %s1, %s359
      %v361 = vld [vmem:[%s360] sm:$0x1]
      %v362 = vadd.f32 %v361, 0.0
      %s363 = sadd.s32 %s358, 1
      %s364 = sld [smem:[#allocation3 + %s363]]
      %s365 = scalar_lea.vmem %s1, %s364
      %v366 = vld [vmem:[%s365] sm:$0x1]
      %v367 = vadd.f32 %v362, %v366
      %s368 = sadd.s32 %s358, 2
      %s369 = sld [smem:[#allocation3 + %s368]]
      %s370 = scalar_lea.vmem %s1, %s369
      %v371 = vld [vmem:[%s370] sm:$0x1]
      %v372 = vadd.f32 %v367, %v371
      %s373 = sadd.s32 %s358, 3
      %s374 = sld [smem:[#allocation3 + %s373]]
      %s375 = scalar_lea.vmem %s1, %s374
      %v376 = vld [vmem:[%s375] sm:$0x1]
      %v377 = vadd.f32 %v372, %v376
      %s378 = sadd.s32 %s358, 4
      %s379 = sld [smem:[#allocation3 + %s378]]
      %s380 = scalar_lea.vmem %s1, %s379
      %v381 = vld [vmem:[%s380] sm:$0x1]
      %v382 = vadd.f32 %v377, %v381
      %s383 = sadd.s32 %s358, 5
      %s384 = sld [smem:[#allocation3 + %s383]]
      %s385 = scalar_lea.vmem %s1, %s384
      %v386 = vld [vmem:[%s385] sm:$0x1]
      %v387 = vadd.f32 %v382, %v386
      %s388 = sadd.s32 %s358, 6
      %s389 = sld [smem:[#allocation3 + %s388]]
      %s390 = scalar_lea.vmem %s1, %s389
      %v391 = vld [vmem:[%s390] sm:$0x1]
      %v392 = vadd.f32 %v387, %v391
      %s393 = sadd.s32 %s358, 7
      %s394 = sld [smem:[#allocation3 + %s393]]
      %s395 = scalar_lea.vmem %s1, %s394
      %v396 = vld [vmem:[%s395] sm:$0x1]
      %v397 = vadd.f32 %v392, %v396
      %398 = vst.msk [vmem:[%s103 + $0x6] sm:$0x1] %vm145, %v397
      %s399 = sadd.s32 %s104, 7
      %s400 = smul.u32 %s399, 128
      %s401 = sld [smem:[#allocation3 + %s400]]
      %s402 = scalar_lea.vmem %s1, %s401
      %v403 = vld [vmem:[%s402] sm:$0x1]
      %v404 = vadd.f32 %v403, 0.0
      %s405 = sadd.s32 %s400, 1
      %s406 = sld [smem:[#allocation3 + %s405]]
      %s407 = scalar_lea.vmem %s1, %s406
      %v408 = vld [vmem:[%s407] sm:$0x1]
      %v409 = vadd.f32 %v404, %v408
      %s410 = sadd.s32 %s400, 2
      %s411 = sld [smem:[#allocation3 + %s410]]
      %s412 = scalar_lea.vmem %s1, %s411
      %v413 = vld [vmem:[%s412] sm:$0x1]
      %v414 = vadd.f32 %v409, %v413
      %s415 = sadd.s32 %s400, 3
      %s416 = sld [smem:[#allocation3 + %s415]]
      %s417 = scalar_lea.vmem %s1, %s416
      %v418 = vld [vmem:[%s417] sm:$0x1]
      %v419 = vadd.f32 %v414, %v418
      %s420 = sadd.s32 %s400, 4
      %s421 = sld [smem:[#allocation3 + %s420]]
      %s422 = scalar_lea.vmem %s1, %s421
      %v423 = vld [vmem:[%s422] sm:$0x1]
      %v424 = vadd.f32 %v419, %v423
      %s425 = sadd.s32 %s400, 5
      %s426 = sld [smem:[#allocation3 + %s425]]
      %s427 = scalar_lea.vmem %s1, %s426
      %v428 = vld [vmem:[%s427] sm:$0x1]
      %v429 = vadd.f32 %v424, %v428
      %s430 = sadd.s32 %s400, 6
      %s431 = sld [smem:[#allocation3 + %s430]]
      %s432 = scalar_lea.vmem %s1, %s431
      %v433 = vld [vmem:[%s432] sm:$0x1]
      %v434 = vadd.f32 %v429, %v433
      %s435 = sadd.s32 %s400, 7
      %s436 = sld [smem:[#allocation3 + %s435]]
      %s437 = scalar_lea.vmem %s1, %s436
      %v438 = vld [vmem:[%s437] sm:$0x1]
      %v439 = vadd.f32 %v434, %v438
      %440 = vst.msk [vmem:[%s103 + $0x7] sm:$0x1] %vm145, %v439
      %p441 = scmp.lt.s32.totalorder %s21, 1
      %s442 = scalar_select %p441, %s21, 1
      %s443 = smul.addr %s442, 8
      %s444 = scalar_lea.vmem %s2, %s443
      // Predicated region
      $region25: #{tpu_custom_call.1} parent=23 // pred_check
        %p445 = pneg %p60
      $region26: #{tpu_custom_call.1} parent=23 // pred_check_branch
        %447 = sbr.rel (%p445) target = $region28
      $region27: #{tpu_custom_call.1} parent=23 // pred_region
        _
      $region28: #{tpu_custom_call.1} parent=23 // pred_fallthru
        _
    $region24: #{tpu_custom_call.1} parent=5 // pred_fallthru
      _
    %p448 = scmp.le.s32.totalorder 2, %s16
    // Predicated region
    $region29: #{tpu_custom_call.1} parent=5 // pred_check
      %p449 = pneg %p448
    $region30: #{tpu_custom_call.1} parent=5 // pred_check_branch
      %451 = sbr.rel (%p449) target = $region32
    $region31: #{tpu_custom_call.1} parent=5 // pred_region
      %s452 = ssub.s32 %s16, 2
      // Predicated region
      $region33: #{tpu_custom_call.1} parent=31 // pred_check
        %p453 = pneg %p66
      $region34: #{tpu_custom_call.1} parent=31 // pred_check_branch
        %455 = sbr.rel (%p453) target = $region36
      $region35: #{tpu_custom_call.1} parent=31 // pred_region
        %p456 = scmp.lt.s32.totalorder %s22, 1
        %s457 = scalar_select %p456, %s22, 1
        %s458 = smul.addr %s457, 8
        %s459 = scalar_lea.vmem %s2, %s458
      $region36: #{tpu_custom_call.1} parent=31 // pred_fallthru
        _
    $region32: #{tpu_custom_call.1} parent=5 // pred_fallthru
      _
  $region6: #{tpu_custom_call.1} parent=0 // loop_footer
    %s20 = sadd.s32 1, %s16
  $region7: #{tpu_custom_call.1} parent=0 // loop_footer_branch
    %15 = sbr.rel target = $region3
  $region8: #{tpu_custom_call.1} parent=0 // loop_exit
    _

</llo_original>
